<compile_context>
chip_gen: v5e
topology: v5e:2x2
jax: 0.10.0
libtpu: 0.0.40
codegen_flags: <defaults>
</compile_context>

<pallas_src>
import jax
import jax.numpy as jnp
from jax.experimental import pallas as pl
from jax.experimental.pallas import tpu as pltpu


def _cdiv(a, b):
    return (a + b - 1) // b


def _round_up(x, m):
    return _cdiv(x, m) * m


def _per_row_vmem_bytes(c, in_itemsize):
    # 2x double-buffered logits block (native dtype)
    # + ~6 full-width f32 temporaries (cast, shifted, exp, iota, onehot, select)
    # + 2 narrow (tile_n, 1) blocks (targets in, logp_t out), each padded to
    #   128 lanes in VMEM and double buffered.
    return 2 * c * in_itemsize + 6 * c * 4 + 2 * 2 * 128 * 4


def _vmem_budget_and_limit():
    """(tile working-set budget, scoped vmem_limit cap) per TPU generation."""
    phys = 64 << 20  # conservative default: v7x per-TC VMEM
    try:
        info = pltpu.get_tpu_info()
        cap = getattr(info, "vmem_capacity_bytes", None)
        if cap:
            phys = int(cap)
    except Exception:
        pass
    if phys >= (128 << 20):          # v5e / v6e: 128 MiB physical VMEM
        return 72 << 20, 96 << 20
    return 36 << 20, 48 << 20        # v7x (or unknown): 64 MiB physical VMEM


def _choose_tile_n(n, c, in_itemsize, vmem_budget, min_steps=4):
    """Pick the row-tile size for the (N, C) logits stream.

      * working set must fit `vmem_budget` (see _per_row_vmem_bytes);
      * bytes-based cap: no benefit growing the logits tile past ~4 MiB;
      * keep at least `min_steps` grid steps so the "parallel" axis can shard
        across both v7x TensorCores and the DMA pipeline overlaps;
      * alignment: multiples of 128 preferred; multiples of 8/16 allowed when
        a large C forces a small tile (only the lane dim needs 128).
    """
    sub = 16 if in_itemsize < 4 else 8
    per_row = _per_row_vmem_bytes(c, in_itemsize)
    cap_rows = max(sub, vmem_budget // per_row)
    cap_bytes = max(256, (4 << 20) // max(1, c * in_itemsize))
    tile = min(cap_rows, cap_bytes, 16384)
    tile = min(tile, _round_up(_cdiv(max(n, 1), min_steps), 128))
    tile = min(tile, _round_up(max(n, 1), sub))
    if tile >= 128:
        tile = tile // 128 * 128
    else:
        tile = max(sub, tile // sub * sub)
    return int(tile)


def _focal_logp_kernel(logits_ref, targets_ref, logp_ref):
    """One grid step: (tile_n, C) logits tile -> (tile_n, 1) logp_t column.

    Rows of the last (ragged) block that fall beyond N read undefined data;
    all math is row-local and Pallas drops their out-of-bounds output stores.
    """
    x = logits_ref[...].astype(jnp.float32)                    # (TN, C)
    t = targets_ref[...]                                       # (TN, 1) int32

    # Numerically-stable log-softmax denominator along the class (lane) axis.
    m = jnp.max(x, axis=1, keepdims=True)                      # (TN, 1)
    sumexp = jnp.sum(jnp.exp(x - m), axis=1, keepdims=True)    # single full-tile exp

    # gather(1, targets) == masked lane reduction with a one-hot class mask
    # (a compare, not an index: garbage targets in padding rows are harmless).
    col = jax.lax.broadcasted_iota(jnp.int32, x.shape, 1)
    x_t = jnp.sum(jnp.where(col == t, x, 0.0), axis=1, keepdims=True)

    logp_ref[...] = (x_t - m) - jnp.log(sumexp)                # (TN, 1)


def focal_loss(inputs, targets, *, gamma=2.0, alpha=None, reduction='mean',
               tile_n=None, cast_logits_to_bf16=False):
    """Pallas focal loss.  inputs: (N, C) float logits, targets: (N,) int."""
    N, C = inputs.shape
    targets = targets.reshape(-1)

    # Normalize alpha exactly like the PyTorch __init__.
    if isinstance(alpha, bool):
        raise TypeError("alpha must be float, int, list/tuple, array or None")
    if isinstance(alpha, (float, int)):
        alpha_arr = jnp.array([alpha, 1.0 - alpha], dtype=jnp.float32)
    elif isinstance(alpha, (list, tuple)):
        alpha_arr = jnp.asarray(alpha, dtype=jnp.float32)
    elif alpha is not None:
        alpha_arr = jnp.asarray(alpha, dtype=jnp.float32)
    else:
        alpha_arr = None

    if cast_logits_to_bf16 and inputs.dtype != jnp.bfloat16:
        inputs = inputs.astype(jnp.bfloat16)   # halves the HBM stream (opt-in)

    in_itemsize = jnp.dtype(inputs.dtype).itemsize
    vmem_budget, vmem_cap = _vmem_budget_and_limit()
    if tile_n is None:
        tile_n = _choose_tile_n(N, C, in_itemsize, vmem_budget)
    else:
        tile_n = max(8, (int(tile_n) // 8) * 8)

    n_blocks = _cdiv(N, tile_n)                 # ragged last block, no padding
    targets_col = targets.astype(jnp.int32).reshape(N, 1)

    working_set = _per_row_vmem_bytes(C, in_itemsize) * tile_n
    vmem_limit = int(min(vmem_cap, max(24 << 20, working_set + (8 << 20))))

    logp_t = pl.pallas_call(
        _focal_logp_kernel,
        grid_spec=pltpu.PrefetchScalarGridSpec(
            num_scalar_prefetch=0,
            grid=(n_blocks,),
            in_specs=[
                pl.BlockSpec((tile_n, C), lambda i: (i, 0)),   # logits (native dtype)
                pl.BlockSpec((tile_n, 1), lambda i: (i, 0)),   # targets
            ],
            out_specs=pl.BlockSpec((tile_n, 1), lambda i: (i, 0)),
        ),
        out_shape=jax.ShapeDtypeStruct((N, 1), jnp.float32),
        compiler_params=pltpu.CompilerParams(
            dimension_semantics=("parallel",),   # no carried state -> both TCs on v7x
            vmem_limit_bytes=vmem_limit),
    )(inputs, targets_col)[:, 0]                 # (N,)

    # O(N) lane-dense tail in plain XLA: exp / focal weight / alpha / reduction.
    p_t = jnp.exp(logp_t)
    one_minus = jnp.maximum(1.0 - p_t, 0.0)
    g = float(gamma)
    if g.is_integer() and 0.0 <= g <= 8.0:
        w = jnp.ones_like(one_minus)
        for _ in range(int(g)):                  # integer gamma: no pow()
            w = w * one_minus
    else:
        w = one_minus ** g
    loss = -w * logp_t

    if alpha_arr is not None:
        loss = loss * alpha_arr[targets.astype(jnp.int32)]

    if reduction == 'mean':
        return jnp.mean(loss)
    if reduction == 'sum':
        return jnp.sum(loss)
    return loss


def _reference_focal_loss(inputs, targets, gamma, alpha, reduction):
    """Pure-JAX reference (mirrors the PyTorch forward)."""
    logp = jax.nn.log_softmax(inputs.astype(jnp.float32), axis=1)
    p = jnp.exp(logp)
    p_t = jnp.take_along_axis(p, targets[:, None], axis=1)[:, 0]
    logp_t = jnp.take_along_axis(logp, targets[:, None], axis=1)[:, 0]
    loss = -((1.0 - p_t) ** gamma) * logp_t
    if alpha is not None:
        loss = loss * jnp.asarray(alpha, jnp.float32)[targets]
    if reduction == 'mean':
        return loss.mean()
    if reduction == 'sum':
        return loss.sum()
    return loss


if __name__ == "__main__":
    key = jax.random.PRNGKey(0)
    N, C = 64, 32
    k1, k2, k3 = jax.random.split(key, 3)
    logits = jax.random.normal(k1, (N, C), dtype=jnp.float32)
    targets = jax.random.randint(k2, (N,), 0, C, dtype=jnp.int32)

    # Deterministic per-class alpha weights (hyperparameters, not learned).
    alpha = [0.5 + 0.5 * (c / (C - 1)) for c in range(C)]

    # mean reduction with per-class alpha
    out_mean = focal_loss(logits, targets, gamma=2.0, alpha=alpha,
                          reduction='mean')
    out_mean = jax.block_until_ready(out_mean)
    ref = _reference_focal_loss(logits, targets, 2.0, alpha, 'mean')
    assert jnp.allclose(out_mean, ref, rtol=1e-5, atol=1e-5), (out_mean, ref)

    # 'none' reduction, no alpha
    out_none = jax.block_until_ready(
        focal_loss(logits, targets, gamma=2.0, alpha=None, reduction='none'))
    ref_none = _reference_focal_loss(logits, targets, 2.0, None, 'none')
    assert jnp.allclose(out_none, ref_none, rtol=1e-5, atol=1e-5)

    # sum reduction, non-integer gamma, ragged N across multiple tiles
    # (N=200 with tile_n=128 -> 2 grid steps, last block partial, no padding).
    N2 = 200
    k4, k5 = jax.random.split(k3)
    logits2 = jax.random.normal(k4, (N2, C), dtype=jnp.float32)
    targets2 = jax.random.randint(k5, (N2,), 0, C, dtype=jnp.int32)
    out_sum = jax.block_until_ready(
        focal_loss(logits2, targets2, gamma=1.5, alpha=None, reduction='sum',
                   tile_n=128))
    ref_sum = _reference_focal_loss(logits2, targets2, 1.5, None, 'sum')
    assert jnp.allclose(out_sum, ref_sum, rtol=1e-5, atol=1e-4), (out_sum, ref_sum)

    # default auto-tile path on the ragged shape as well
    out_mean2 = jax.block_until_ready(
        focal_loss(logits2, targets2, gamma=2.0, alpha=alpha, reduction='mean'))
    ref_mean2 = _reference_focal_loss(logits2, targets2, 2.0, alpha, 'mean')
    assert jnp.allclose(out_mean2, ref_mean2, rtol=1e-5, atol=1e-5)

    print("KERNEL_OK")
</pallas_src>

<mosaic_0001>
module attributes {stable_mosaic.version = 11 : i64} {
  func.func @_focal_logp_kernel(%arg0: i32, %arg1: memref<64x32xf32, #tpu.memory_space<vmem>>, %arg2: memref<64x1xi32, #tpu.memory_space<vmem>>, %arg3: memref<64x1xf32, #tpu.memory_space<vmem>>) attributes {dimension_semantics = [#tpu.dimension_semantics<parallel>], iteration_bounds = array<i64: 1>, scalar_prefetch = 0 : i64, scratch_operands = 0 : i64, tpu.core_type = #tpu.core_type<tc>, window_params = [{transform_indices = @transform_0, window_bounds = array<i64: 64, 32>}, {transform_indices = @transform_1, window_bounds = array<i64: 64, 1>}, {transform_indices = @transform_2, window_bounds = array<i64: 64, 1>}]} {
    %c0 = arith.constant 0 : index
    %c0_0 = arith.constant 0 : index
    %0 = vector.load %arg1[%c0, %c0_0] : memref<64x32xf32, #tpu.memory_space<vmem>>, vector<64x32xf32>
    %c0_1 = arith.constant 0 : index
    %c0_2 = arith.constant 0 : index
    %1 = vector.load %arg2[%c0_1, %c0_2] : memref<64x1xi32, #tpu.memory_space<vmem>>, vector<64x1xi32>
    %cst = arith.constant dense<0xFF800000> : vector<64xf32>
    %2 = vector.multi_reduction <maximumf>, %0, %cst [1] : vector<64x32xf32> to vector<64xf32>
    %3 = vector.shape_cast %2 : vector<64xf32> to vector<64x1xf32>
    %4 = vector.broadcast %3 : vector<64x1xf32> to vector<64x32xf32>
    %5 = arith.subf %0, %4 : vector<64x32xf32>
    %6 = math.exp %5 : vector<64x32xf32>
    %cst_3 = arith.constant dense<0.000000e+00> : vector<64xf32>
    %7 = vector.multi_reduction <add>, %6, %cst_3 [1] : vector<64x32xf32> to vector<64xf32>
    %8 = vector.shape_cast %7 : vector<64xf32> to vector<64x1xf32>
    %9 = tpu.iota {dimensions = array<i32: 1>} : vector<64x32xi32>
    %10 = vector.broadcast %1 : vector<64x1xi32> to vector<64x32xi32>
    %11 = arith.cmpi eq, %9, %10 : vector<64x32xi32>
    %cst_4 = arith.constant 0.000000e+00 : f32
    %12 = vector.broadcast %cst_4 : f32 to vector<64x32xf32>
    %13 = arith.select %11, %0, %12 : vector<64x32xi1>, vector<64x32xf32>
    %cst_5 = arith.constant dense<0.000000e+00> : vector<64xf32>
    %14 = vector.multi_reduction <add>, %13, %cst_5 [1] : vector<64x32xf32> to vector<64xf32>
    %15 = vector.shape_cast %14 : vector<64xf32> to vector<64x1xf32>
    %16 = arith.subf %15, %3 : vector<64x1xf32>
    %17 = math.log %8 : vector<64x1xf32>
    %18 = arith.subf %16, %17 : vector<64x1xf32>
    %c0_6 = arith.constant 0 : index
    %c0_7 = arith.constant 0 : index
    %19 = vector.load %arg3[%c0_6, %c0_7] : memref<64x1xf32, #tpu.memory_space<vmem>>, vector<64x1xf32>
    tpu.vector_store %arg3[%c0_6, %c0_7], %18 {strides = array<i32>} : memref<64x1xf32, #tpu.memory_space<vmem>>, vector<64x1xf32>,
    return
  }
  func.func @transform_0(%arg0: i32) -> (i32, i32) {
    %c0_i32 = arith.constant 0 : i32
    %c0_i32_0 = arith.constant 0 : i32
    return %arg0, %c0_i32 : i32, i32
  }
  func.func @transform_1(%arg0: i32) -> (i32, i32) {
    %c0_i32 = arith.constant 0 : i32
    %c0_i32_0 = arith.constant 0 : i32
    return %arg0, %c0_i32 : i32, i32
  }
  func.func @transform_2(%arg0: i32) -> (i32, i32) {
    %c0_i32 = arith.constant 0 : i32
    %c0_i32_0 = arith.constant 0 : i32
    return %arg0, %c0_i32 : i32, i32
  }
}

</mosaic_0001>

<llo_original>
// kernel: tpu_custom_call.1
$region0: #{tpu_custom_call.1}
  #allocation0 [shape = 'u32[]', space=smem, size = 0x4, offset = 0x4, fixed_abs, tag = 'smem constant byte address 0x4 - core index']
  #allocation1 [shape = 'u32[72,128]{1,0:T(1,128)}', space=vmem, size = 0x9000, scoped, tag = 'internal scratch']
  %s0 = inlined_call_operand.vmem [shape: f32[64,32], index: 0, kind: input, shape index: {}]
  %s1 = inlined_call_operand.vmem [shape: s32[64,1], index: 1, kind: input, shape index: {}]
  %s2 = inlined_call_operand.vmem [shape: f32[64,1], index: 2, kind: output, shape index: {}]
  %s3 = sld [smem:[#allocation0]]
  $region18: #{tpu_custom_call.1} parent=0
    _
  %s5 = ssub.s32 1, %s3
  %s6 = scalar_select 0, %s5, %s3
  // Predicated region
  $region2: #{tpu_custom_call.1} parent=0 // pred_check
    _
  $region3: #{tpu_custom_call.1} parent=0 // pred_check_branch
    %8 = sbr.rel (0) target = $region5
  $region4: #{tpu_custom_call.1} parent=0 // pred_region
    _
  $region5: #{tpu_custom_call.1} parent=0 // pred_fallthru
    _
  // Predicated region
  $region6: #{tpu_custom_call.1} parent=0 // pred_check
    _
  $region7: #{tpu_custom_call.1} parent=0 // pred_check_branch
    %10 = sbr.rel (0) target = $region9
  $region8: #{tpu_custom_call.1} parent=0 // pred_region
    _
  $region9: #{tpu_custom_call.1} parent=0 // pred_fallthru
    _
  %v11 = vld [vmem:[%s0] sm:$0xff]
  %v12 = vld [vmem:[%s0 + $0x8] sm:$0xff]
  %v13 = vld [vmem:[%s0 + $0x10] sm:$0xff]
  %v14 = vld [vmem:[%s0 + $0x18] sm:$0xff]
  %v15 = vld [vmem:[%s0 + $0x20] sm:$0xff]
  %v16 = vld [vmem:[%s0 + $0x28] sm:$0xff]
  %v17 = vld [vmem:[%s0 + $0x30] sm:$0xff]
  %v18 = vld [vmem:[%s0 + $0x38] sm:$0xff]
  %v19 = vld [vmem:[%s1] sm:$0xff]
  %v20 = vld [vmem:[%s1 + $0x8] sm:$0xff]
  %v21 = vld [vmem:[%s1 + $0x10] sm:$0xff]
  %v22 = vld [vmem:[%s1 + $0x18] sm:$0xff]
  %v23 = vld [vmem:[%s1 + $0x20] sm:$0xff]
  %v24 = vld [vmem:[%s1 + $0x28] sm:$0xff]
  %v25 = vld [vmem:[%s1 + $0x30] sm:$0xff]
  %v26 = vld [vmem:[%s1 + $0x38] sm:$0xff]
  %vm27 = vcmask 261120
  %v28 = vsel %vm27, %v11, -inf
  %29 = vmax.xlane.f32.xlu0 %v28
  %v30 = vpop.xlane.xlu0 %29
  %v31 = vsel %vm27, %v12, -inf
  %32 = vmax.xlane.f32.xlu0 %v31
  %v33 = vpop.xlane.xlu0 %32
  %v34 = vsel %vm27, %v13, -inf
  %35 = vmax.xlane.f32.xlu0 %v34
  %v36 = vpop.xlane.xlu0 %35
  %v37 = vsel %vm27, %v14, -inf
  %38 = vmax.xlane.f32.xlu0 %v37
  %v39 = vpop.xlane.xlu0 %38
  %v40 = vsel %vm27, %v15, -inf
  %41 = vmax.xlane.f32.xlu0 %v40
  %v42 = vpop.xlane.xlu0 %41
  %v43 = vsel %vm27, %v16, -inf
  %44 = vmax.xlane.f32.xlu0 %v43
  %v45 = vpop.xlane.xlu0 %44
  %v46 = vsel %vm27, %v17, -inf
  %47 = vmax.xlane.f32.xlu0 %v46
  %v48 = vpop.xlane.xlu0 %47
  %v49 = vsel %vm27, %v18, -inf
  %50 = vmax.xlane.f32.xlu0 %v49
  %v51 = vpop.xlane.xlu0 %50
  %v52 = vsub.f32 %v11, %v30
  %v53 = vsub.f32 %v12, %v33
  %v54 = vsub.f32 %v13, %v36
  %v55 = vsub.f32 %v14, %v39
  %v56 = vsub.f32 %v15, %v42
  %v57 = vsub.f32 %v16, %v45
  %v58 = vsub.f32 %v17, %v48
  %v59 = vsub.f32 %v18, %v51
  %v60 = vmul.f32 %v52, 1.442695
  %v61 = vpow.pop %v60
  %v62 = vmul.f32 %v53, 1.442695
  %v63 = vpow.pop %v62
  %v64 = vmul.f32 %v54, 1.442695
  %v65 = vpow.pop %v64
  %v66 = vmul.f32 %v55, 1.442695
  %v67 = vpow.pop %v66
  %v68 = vmul.f32 %v56, 1.442695
  %v69 = vpow.pop %v68
  %v70 = vmul.f32 %v57, 1.442695
  %v71 = vpow.pop %v70
  %v72 = vmul.f32 %v58, 1.442695
  %v73 = vpow.pop %v72
  %v74 = vmul.f32 %v59, 1.442695
  %v75 = vpow.pop %v74
  %v76 = vsel %vm27, %v61, 0.0
  %77 = vadd.xlane.f32.xlu0 %v76
  %v78 = vpop.xlane.xlu0 %77
  %v79 = vsel %vm27, %v63, 0.0
  %80 = vadd.xlane.f32.xlu0 %v79
  %v81 = vpop.xlane.xlu0 %80
  %v82 = vsel %vm27, %v65, 0.0
  %83 = vadd.xlane.f32.xlu0 %v82
  %v84 = vpop.xlane.xlu0 %83
  %v85 = vsel %vm27, %v67, 0.0
  %86 = vadd.xlane.f32.xlu0 %v85
  %v87 = vpop.xlane.xlu0 %86
  %v88 = vsel %vm27, %v69, 0.0
  %89 = vadd.xlane.f32.xlu0 %v88
  %v90 = vpop.xlane.xlu0 %89
  %v91 = vsel %vm27, %v71, 0.0
  %92 = vadd.xlane.f32.xlu0 %v91
  %v93 = vpop.xlane.xlu0 %92
  %v94 = vsel %vm27, %v73, 0.0
  %95 = vadd.xlane.f32.xlu0 %v94
  %v96 = vpop.xlane.xlu0 %95
  %v97 = vsel %vm27, %v75, 0.0
  %98 = vadd.xlane.f32.xlu0 %v97
  %v99 = vpop.xlane.xlu0 %98
  %v100 = vlaneseq
  %v101 = vand.u32 %v100, 127
  %102 = vset.pattern.permute.xlu0 0
  %103 = vperm.xlu0 %102, %v19
  %v104 = vpop.permute.xlu0 %103
  %105 = vset.pattern.permute.xlu0 0
  %106 = vperm.xlu0 %105, %v20
  %v107 = vpop.permute.xlu0 %106
  %108 = vset.pattern.permute.xlu0 0
  %109 = vperm.xlu0 %108, %v21
  %v110 = vpop.permute.xlu0 %109
  %111 = vset.pattern.permute.xlu0 0
  %112 = vperm.xlu0 %111, %v22
  %v113 = vpop.permute.xlu0 %112
  %114 = vset.pattern.permute.xlu0 0
  %115 = vperm.xlu0 %114, %v23
  %v116 = vpop.permute.xlu0 %115
  %117 = vset.pattern.permute.xlu0 0
  %118 = vperm.xlu0 %117, %v24
  %v119 = vpop.permute.xlu0 %118
  %120 = vset.pattern.permute.xlu0 0
  %121 = vperm.xlu0 %120, %v25
  %v122 = vpop.permute.xlu0 %121
  %123 = vset.pattern.permute.xlu0 0
  %124 = vperm.xlu0 %123, %v26
  %v125 = vpop.permute.xlu0 %124
  %vm126 = vcmp.eq.s32.totalorder %v101, %v104
  %vm127 = vcmp.eq.s32.totalorder %v101, %v107
  %vm128 = vcmp.eq.s32.totalorder %v101, %v110
  %vm129 = vcmp.eq.s32.totalorder %v101, %v113
  %vm130 = vcmp.eq.s32.totalorder %v101, %v116
  %vm131 = vcmp.eq.s32.totalorder %v101, %v119
  %vm132 = vcmp.eq.s32.totalorder %v101, %v122
  %vm133 = vcmp.eq.s32.totalorder %v101, %v125
  %v134 = vsel %vm126, %v11, 0.0
  %v135 = vsel %vm127, %v12, 0.0
  %v136 = vsel %vm128, %v13, 0.0
  %v137 = vsel %vm129, %v14, 0.0
  %v138 = vsel %vm130, %v15, 0.0
  %v139 = vsel %vm131, %v16, 0.0
  %v140 = vsel %vm132, %v17, 0.0
  %v141 = vsel %vm133, %v18, 0.0
  %v142 = vsel %vm27, %v134, 0.0
  %143 = vadd.xlane.f32.xlu0 %v142
  %v144 = vpop.xlane.xlu0 %143
  %v145 = vsel %vm27, %v135, 0.0
  %146 = vadd.xlane.f32.xlu0 %v145
  %v147 = vpop.xlane.xlu0 %146
  %v148 = vsel %vm27, %v136, 0.0
  %149 = vadd.xlane.f32.xlu0 %v148
  %v150 = vpop.xlane.xlu0 %149
  %v151 = vsel %vm27, %v137, 0.0
  %152 = vadd.xlane.f32.xlu0 %v151
  %v153 = vpop.xlane.xlu0 %152
  %v154 = vsel %vm27, %v138, 0.0
  %155 = vadd.xlane.f32.xlu0 %v154
  %v156 = vpop.xlane.xlu0 %155
  %v157 = vsel %vm27, %v139, 0.0
  %158 = vadd.xlane.f32.xlu0 %v157
  %v159 = vpop.xlane.xlu0 %158
  %v160 = vsel %vm27, %v140, 0.0
  %161 = vadd.xlane.f32.xlu0 %v160
  %v162 = vpop.xlane.xlu0 %161
  %v163 = vsel %vm27, %v141, 0.0
  %164 = vadd.xlane.f32.xlu0 %v163
  %v165 = vpop.xlane.xlu0 %164
  %v166 = vsub.f32 %v144, %v30
  %v167 = vsub.f32 %v147, %v33
  %v168 = vsub.f32 %v150, %v36
  %v169 = vsub.f32 %v153, %v39
  %v170 = vsub.f32 %v156, %v42
  %v171 = vsub.f32 %v159, %v45
  %v172 = vsub.f32 %v162, %v48
  %v173 = vsub.f32 %v165, %v51
  %v174 = vlog2.pop %v78
  %v175 = vmul.f32 %v174, 0.6931472
  %v176 = vlog2.pop %v81
  %v177 = vmul.f32 %v176, 0.6931472
  %v178 = vlog2.pop %v84
  %v179 = vmul.f32 %v178, 0.6931472
  %v180 = vlog2.pop %v87
  %v181 = vmul.f32 %v180, 0.6931472
  %v182 = vlog2.pop %v90
  %v183 = vmul.f32 %v182, 0.6931472
  %v184 = vlog2.pop %v93
  %v185 = vmul.f32 %v184, 0.6931472
  %v186 = vlog2.pop %v96
  %v187 = vmul.f32 %v186, 0.6931472
  %v188 = vlog2.pop %v99
  %v189 = vmul.f32 %v188, 0.6931472
  %v190 = vsub.f32 %v166, %v175
  %v191 = vsub.f32 %v167, %v177
  %v192 = vsub.f32 %v168, %v179
  %v193 = vsub.f32 %v169, %v181
  %v194 = vsub.f32 %v170, %v183
  %v195 = vsub.f32 %v171, %v185
  %v196 = vsub.f32 %v172, %v187
  %v197 = vsub.f32 %v173, %v189
  %vm198 = vcmask 7168
  %199 = vst.msk [vmem:[%s2] sm:$0xff] %vm198, %v190
  %200 = vst.msk [vmem:[%s2 + $0x8] sm:$0xff] %vm198, %v191
  %201 = vst.msk [vmem:[%s2 + $0x10] sm:$0xff] %vm198, %v192
  %202 = vst.msk [vmem:[%s2 + $0x18] sm:$0xff] %vm198, %v193
  %203 = vst.msk [vmem:[%s2 + $0x20] sm:$0xff] %vm198, %v194
  %204 = vst.msk [vmem:[%s2 + $0x28] sm:$0xff] %vm198, %v195
  %205 = vst.msk [vmem:[%s2 + $0x30] sm:$0xff] %vm198, %v196
  %206 = vst.msk [vmem:[%s2 + $0x38] sm:$0xff] %vm198, %v197
  // Predicated region
  $region10: #{tpu_custom_call.1} parent=0 // pred_check
    _
  $region11: #{tpu_custom_call.1} parent=0 // pred_check_branch
    %208 = sbr.rel (0) target = $region13
  $region12: #{tpu_custom_call.1} parent=0 // pred_region
    _
  $region13: #{tpu_custom_call.1} parent=0 // pred_fallthru
    _
  // Predicated region
  $region14: #{tpu_custom_call.1} parent=0 // pred_check
    _
  $region15: #{tpu_custom_call.1} parent=0 // pred_check_branch
    %210 = sbr.rel (0) target = $region17
  $region16: #{tpu_custom_call.1} parent=0 // pred_region
    _
  $region17: #{tpu_custom_call.1} parent=0 // pred_fallthru
    _

</llo_original>
